<compile_context>
chip_gen: v5e
topology: v5e:2x2
jax: 0.10.0
libtpu: 0.0.40
codegen_flags: <defaults>
</compile_context>

<pallas_src>
import jax
import jax.numpy as jnp
from jax.experimental import pallas as pl
from jax.experimental.pallas import tpu as pltpu


# ----------------------------- kernels ------------------------------------

def _sqrt_one_plus_kernel_smem_out(x_ref, y_ref, o_ref):
    # All refs in SMEM. Pure scalar path: no vreg tile, no output DMA.
    xy = x_ref[0] * y_ref[0]          # scalar ALU
    o_ref[0] = jnp.sqrt(1.0 + xy * xy)  # scalar store of the 4-byte result


def _sqrt_one_plus_kernel_vmem_out(x_ref, y_ref, o_ref):
    # Fallback (proven to lower): scalar mul/add, one EUP sqrt on a (1,1) tile.
    xy = x_ref[0] * y_ref[0]          # scalar ALU
    t = 1.0 + xy * xy                 # scalar ALU
    o_ref[...] = jnp.sqrt(jnp.full((1, 1), t, dtype=jnp.float32))


_SMEM_SPEC = pl.BlockSpec(memory_space=pltpu.MemorySpace.SMEM)
_VMEM_SPEC = pl.BlockSpec(memory_space=pltpu.MemorySpace.VMEM)


# ----------------------------- wrappers ------------------------------------

@jax.jit
def _sqrt_one_plus_smem(x, y):
    # Grid-less call: nothing to pipeline; skip CompilerParams entirely.
    return pl.pallas_call(
        _sqrt_one_plus_kernel_smem_out,
        out_shape=jax.ShapeDtypeStruct((1,), jnp.float32),
        in_specs=[_SMEM_SPEC, _SMEM_SPEC],
        out_specs=_SMEM_SPEC,
    )(x.astype(jnp.float32), y.astype(jnp.float32))


@jax.jit
def _sqrt_one_plus_vmem(x, y):
    out = pl.pallas_call(
        _sqrt_one_plus_kernel_vmem_out,
        out_shape=jax.ShapeDtypeStruct((1, 1), jnp.float32),
        in_specs=[_SMEM_SPEC, _SMEM_SPEC],
        out_specs=_VMEM_SPEC,
    )(x.astype(jnp.float32), y.astype(jnp.float32))
    return out.reshape(1)  # fused inside the same jit (trivial 4-byte bitcast)


_IMPL = None


def sqrt_one_plus(x, y):
    """x, y: float32 arrays of shape (1,). Returns float32 array of shape (1,)."""
    global _IMPL
    if _IMPL is None:
        # One-time probe: prefer the all-SMEM scalar variant; fall back to the
        # VMEM-tile variant if scalar f32 sqrt does not lower on this build.
        probe = jnp.zeros((1,), jnp.float32)
        try:
            jax.block_until_ready(_sqrt_one_plus_smem(probe, probe))
            _IMPL = _sqrt_one_plus_smem
        except Exception:
            _IMPL = _sqrt_one_plus_vmem
    return _IMPL(x, y)


# ------------------------------ main ---------------------------------------

if __name__ == "__main__":
    # Deterministic "starting_point" parameter init (the module's __init__
    # takes a 2-element starting point; we draw it from PRNGKey(0)).
    key = jax.random.PRNGKey(0)
    kx, ky = jax.random.split(key)
    x_param = jax.random.normal(kx, (1,), dtype=jnp.float32)  # self._x
    y_param = jax.random.normal(ky, (1,), dtype=jnp.float32)  # self._y

    result = sqrt_one_plus(x_param, y_param)
    jax.block_until_ready(result)

    # Reference check in plain JAX (what the module would return).
    expected = jnp.sqrt(1.0 + (x_param * y_param) ** 2)
    assert result.shape == (1,) and result.dtype == jnp.float32
    assert jnp.allclose(result, expected, rtol=1e-6, atol=1e-6)

    print("KERNEL_OK")
</pallas_src>

<mosaic_0001>
module attributes {stable_mosaic.version = 11 : i64} {
  func.func @_sqrt_one_plus_kernel_smem_out(%arg0: memref<1xf32, #tpu.memory_space<smem>>, %arg1: memref<1xf32, #tpu.memory_space<smem>>, %arg2: memref<1xf32, #tpu.memory_space<smem>>) attributes {dimension_semantics = [], scalar_prefetch = 0 : i64, scratch_operands = 0 : i64, tpu.core_type = #tpu.core_type<tc>} {
    %c0 = arith.constant 0 : index
    %0 = memref.load %arg0[%c0] : memref<1xf32, #tpu.memory_space<smem>>
    %c0_0 = arith.constant 0 : index
    %1 = memref.load %arg1[%c0_0] : memref<1xf32, #tpu.memory_space<smem>>
    %2 = arith.mulf %0, %1 : f32
    %3 = arith.mulf %2, %2 : f32
    %cst = arith.constant 1.000000e+00 : f32
    %4 = arith.addf %cst, %3 : f32
    %5 = math.sqrt %4 : f32
    %c0_1 = arith.constant 0 : index
    %6 = memref.load %arg2[%c0_1] : memref<1xf32, #tpu.memory_space<smem>>
    memref.store %5, %arg2[%c0_1] : memref<1xf32, #tpu.memory_space<smem>>
    return
  }
}

module attributes {stable_mosaic.version = 11 : i64} {
  func.func @_sqrt_one_plus_kernel_vmem_out(%arg0: memref<1xf32, #tpu.memory_space<smem>>, %arg1: memref<1xf32, #tpu.memory_space<smem>>, %arg2: memref<1x1xf32, #tpu.memory_space<vmem>>) attributes {dimension_semantics = [], scalar_prefetch = 0 : i64, scratch_operands = 0 : i64, tpu.core_type = #tpu.core_type<tc>} {
    %c0 = arith.constant 0 : index
    %0 = memref.load %arg0[%c0] : memref<1xf32, #tpu.memory_space<smem>>
    %c0_0 = arith.constant 0 : index
    %1 = memref.load %arg1[%c0_0] : memref<1xf32, #tpu.memory_space<smem>>
    %2 = arith.mulf %0, %1 : f32
    %3 = arith.mulf %2, %2 : f32
    %cst = arith.constant 1.000000e+00 : f32
    %4 = arith.addf %cst, %3 : f32
    %5 = vector.broadcast %4 : f32 to vector<1x1xf32>
    %6 = math.sqrt %5 : vector<1x1xf32>
    %c0_1 = arith.constant 0 : index
    %c0_2 = arith.constant 0 : index
    %7 = vector.load %arg2[%c0_1, %c0_2] : memref<1x1xf32, #tpu.memory_space<vmem>>, vector<1x1xf32>
    tpu.vector_store %arg2[%c0_1, %c0_2], %6 {strides = array<i32>} : memref<1x1xf32, #tpu.memory_space<vmem>>, vector<1x1xf32>,
    return
  }
}

</mosaic_0001>

<llo_original>
// kernel: _sqrt_one_plus_smem.1
$region0: #{_sqrt_one_plus_smem.1}
  #allocation0 [shape = 'u32[]', space=smem, size = 0x4, offset = 0x4, fixed_abs, tag = 'smem constant byte address 0x4 - core index']
  #allocation1 [shape = 'u32[72,128]{1,0:T(1,128)}', space=vmem, size = 0x9000, scoped, tag = 'internal scratch']
  #allocation2 [shape = 'f32[1]{0:T(128)S(6)}', space=smem, size = 0x200, scoped, tag = 'scoped memory for _sqrt_one_plus_smem.1']
  #allocation3 [shape = 'f32[1]{0:T(128)S(6)}', space=smem, size = 0x200, scoped, tag = 'scoped memory for _sqrt_one_plus_smem.1']
  %s0 = inlined_call_operand.<no memory space> [shape: f32[1], index: 0, kind: input, shape index: {}]
  %s1 = inlined_call_operand.<no memory space> [shape: f32[1], index: 1, kind: input, shape index: {}]
  %s2 = inlined_call_operand.hbm [shape: f32[1], index: 2, kind: output, shape index: {}]
  %s3 = sld [smem:[#allocation0]]
  $region18: #{_sqrt_one_plus_smem.1} parent=0
    _
  %s5 = ssub.s32 1, %s3
  %s6 = scalar_select 0, %s5, %s3
  %7 = sst [smem:[#allocation2]] %s0
  %8 = sst [smem:[#allocation3]] %s1
  $region1: #{_sqrt_one_plus_smem.1} parent=0
    #allocation4 [shape = 'u8[512]{0}', space=smem, size = 0x200, scoped, tag = 'output window, operand 0, single buffered']
    #allocation5 [shape = 's32[1]{0}', space=sflag, size = 0x4, scoped, tag = 'scoped memory for _sqrt_one_plus_smem.1']
    %9 = vsyncpa [#allocation5], 0
    // Predicated region
    $region2: #{_sqrt_one_plus_smem.1} parent=1 // pred_check
      _
    $region3: #{_sqrt_one_plus_smem.1} parent=1 // pred_check_branch
      %11 = sbr.rel (0) target = $region5
    $region4: #{_sqrt_one_plus_smem.1} parent=1 // pred_region
      _
    $region5: #{_sqrt_one_plus_smem.1} parent=1 // pred_fallthru
      _
    // Predicated region
    $region6: #{_sqrt_one_plus_smem.1} parent=1 // pred_check
      _
    $region7: #{_sqrt_one_plus_smem.1} parent=1 // pred_check_branch
      %13 = sbr.rel (0) target = $region9
    $region8: #{_sqrt_one_plus_smem.1} parent=1 // pred_region
      _
    $region9: #{_sqrt_one_plus_smem.1} parent=1 // pred_fallthru
      _
    %s14 = sld [smem:[#allocation2]]
    %s15 = sld [smem:[#allocation3]]
    %s16 = smul.f32 %s14, %s15
    %s17 = smul.f32 %s16, %s16
    %s18 = sadd.f32 %s17, 1.0
    %v19 = vstv %s18
    %v20 = vrsqrt.pop %v19
    %v21 = vmul.f32 %v20, %v19
    %v22 = vmul.f32 %v21, %v20
    %v23 = vmul.f32 0.5, %v22
    %v24 = vsub.f32 1.5, %v23
    %v25 = vmul.f32 %v20, %v24
    %v26 = vmul.f32 %v19, %v25
    %vm27 = vcmp.eq.f32.partialorder %v19, inf
    %v28 = vsel %vm27, %v19, %v26
    %vm29 = vcmp.eq.f32.partialorder %v19, 0.0
    %v30 = vand.u32 %v19, 2147483648
    %v31 = vsel %vm29, %v30, %v28
    %s32 = vtos %v31
    %s33 = scalar_lea.smem [#allocation4], 0
    %34 = sst [smem:[%s33]] %s32
    // Predicated region
    $region10: #{_sqrt_one_plus_smem.1} parent=1 // pred_check
      _
    $region11: #{_sqrt_one_plus_smem.1} parent=1 // pred_check_branch
      %36 = sbr.rel (0) target = $region13
    $region12: #{_sqrt_one_plus_smem.1} parent=1 // pred_region
      %38 = vsyncadd [#allocation5], 0
      %s40 = sshll.u32 %s2, 4
      %s41 = int_to_ptr.hbm [resolvable:$true] %s40
      %43 = dma.smem_to_hbm [#allocation4], 16, %s41, [#allocation5]
    $region13: #{_sqrt_one_plus_smem.1} parent=1 // pred_fallthru
      _
    // Predicated region
    $region14: #{_sqrt_one_plus_smem.1} parent=1 // pred_check
      _
    $region15: #{_sqrt_one_plus_smem.1} parent=1 // pred_check_branch
      %45 = sbr.rel (0) target = $region17
    $region16: #{_sqrt_one_plus_smem.1} parent=1 // pred_region
      %47 = dma.done [#allocation5], 16
    $region17: #{_sqrt_one_plus_smem.1} parent=1 // pred_fallthru
      _
    %48 = sfence
    %49 = vsyncpa [#allocation5], 1

// kernel: _sqrt_one_plus_vmem.1
$region0: #{_sqrt_one_plus_vmem.1}
  #allocation0 [shape = 'u32[]', space=smem, size = 0x4, offset = 0x4, fixed_abs, tag = 'smem constant byte address 0x4 - core index']
  #allocation1 [shape = 'u32[72,128]{1,0:T(1,128)}', space=vmem, size = 0x9000, scoped, tag = 'internal scratch']
  #allocation2 [shape = 'f32[1]{0:T(128)S(6)}', space=smem, size = 0x200, scoped, tag = 'scoped memory for _sqrt_one_plus_vmem.1']
  #allocation3 [shape = 'f32[1]{0:T(128)S(6)}', space=smem, size = 0x200, scoped, tag = 'scoped memory for _sqrt_one_plus_vmem.1']
  %s0 = inlined_call_operand.<no memory space> [shape: f32[1], index: 0, kind: input, shape index: {}]
  %s1 = inlined_call_operand.<no memory space> [shape: f32[1], index: 1, kind: input, shape index: {}]
  %s2 = inlined_call_operand.hbm [shape: f32[1,1], index: 2, kind: output, shape index: {}]
  %s3 = sld [smem:[#allocation0]]
  $region18: #{_sqrt_one_plus_vmem.1} parent=0
    _
  %s5 = ssub.s32 1, %s3
  %s6 = scalar_select 0, %s5, %s3
  %7 = sst [smem:[#allocation2]] %s0
  %8 = sst [smem:[#allocation3]] %s1
  $region1: #{_sqrt_one_plus_vmem.1} parent=0
    #allocation4 [shape = 'u8[512]{0}', space=vmem, size = 0x400, scoped, tag = 'output window, operand 0, single buffered']
    #allocation5 [shape = 's32[1]{0}', space=sflag, size = 0x4, scoped, tag = 'scoped memory for _sqrt_one_plus_vmem.1']
    %9 = vsyncpa [#allocation5], 0
    // Predicated region
    $region2: #{_sqrt_one_plus_vmem.1} parent=1 // pred_check
      _
    $region3: #{_sqrt_one_plus_vmem.1} parent=1 // pred_check_branch
      %11 = sbr.rel (0) target = $region5
    $region4: #{_sqrt_one_plus_vmem.1} parent=1 // pred_region
      _
    $region5: #{_sqrt_one_plus_vmem.1} parent=1 // pred_fallthru
      _
    // Predicated region
    $region6: #{_sqrt_one_plus_vmem.1} parent=1 // pred_check
      _
    $region7: #{_sqrt_one_plus_vmem.1} parent=1 // pred_check_branch
      %13 = sbr.rel (0) target = $region9
    $region8: #{_sqrt_one_plus_vmem.1} parent=1 // pred_region
      _
    $region9: #{_sqrt_one_plus_vmem.1} parent=1 // pred_fallthru
      _
    %s14 = sld [smem:[#allocation2]]
    %s15 = sld [smem:[#allocation3]]
    %s16 = smul.f32 %s14, %s15
    %s17 = smul.f32 %s16, %s16
    %s18 = sadd.f32 %s17, 1.0
    %v19 = vstv %s18
    %v20 = vrsqrt.pop %v19
    %v21 = vmul.f32 %v20, %v19
    %v22 = vmul.f32 %v21, %v20
    %v23 = vmul.f32 0.5, %v22
    %v24 = vsub.f32 1.5, %v23
    %v25 = vmul.f32 %v20, %v24
    %v26 = vmul.f32 %v19, %v25
    %vm27 = vcmp.eq.f32.partialorder %v19, inf
    %v28 = vsel %vm27, %v19, %v26
    %vm29 = vcmp.eq.f32.partialorder %v19, 0.0
    %v30 = vand.u32 %v19, 2147483648
    %v31 = vsel %vm29, %v30, %v28
    %vm32 = vcmask 0
    %33 = vst.msk [vmem:[#allocation4] sm:$0x1] %vm32, %v31
    // Predicated region
    $region10: #{_sqrt_one_plus_vmem.1} parent=1 // pred_check
      _
    $region11: #{_sqrt_one_plus_vmem.1} parent=1 // pred_check_branch
      %35 = sbr.rel (0) target = $region13
    $region12: #{_sqrt_one_plus_vmem.1} parent=1 // pred_region
      %37 = vsyncadd [#allocation5], 0
      %s39 = sshll.u32 [#allocation4], 4
      %s40 = int_to_ptr.vmem [resolvable:$true] %s39
      %s41 = sshll.u32 %s2, 4
      %s42 = int_to_ptr.hbm [resolvable:$true] %s41
      %44 = dma.vmem_to_hbm [thread:$0]  %s40, 16, %s42, [#allocation5]
    $region13: #{_sqrt_one_plus_vmem.1} parent=1 // pred_fallthru
      _
    // Predicated region
    $region14: #{_sqrt_one_plus_vmem.1} parent=1 // pred_check
      _
    $region15: #{_sqrt_one_plus_vmem.1} parent=1 // pred_check_branch
      %46 = sbr.rel (0) target = $region17
    $region16: #{_sqrt_one_plus_vmem.1} parent=1 // pred_region
      %48 = dma.done [#allocation5], 16
    $region17: #{_sqrt_one_plus_vmem.1} parent=1 // pred_fallthru
      _
    %49 = vsyncpa [#allocation5], 1

</llo_original>
